<compile_context>
chip_gen: v7x
topology: tpu7x:2x2x1
jax: 0.10.0
libtpu: 0.0.40
codegen_flags: <defaults>
</compile_context>

<pallas_src>
import jax
import jax.numpy as jnp
from jax import lax
from jax.experimental import pallas as pl
from jax.experimental.pallas import tpu as pltpu


# ---------------------------------------------------------------------------
# Kernel A: amplitude = |fft(x)|; amp_ext[e] = conv1x1_e(amplitude);
#           out[e] = amp_ext[e] * e^{i*phase}  (returned as re / im parts).
# ---------------------------------------------------------------------------
def _expert_fft_kernel(re_ref, im_ref, w_ref, amp_ref, ore_ref, oim_ref):
    re = re_ref[...]                      # (C, Mb)   pixels on lanes
    im = im_ref[...]                      # (C, Mb)
    w = w_ref[...]                        # (E, C, C) conv weights (out, in)
    C = re.shape[0]
    E = w.shape[0]

    # One transcendental for both |z| and the phase scale:
    #   inv = 1/|z|, amp = |z| = mag2 * inv   (amp == 0 exactly where mag2 == 0)
    mag2 = re * re + im * im
    zero = mag2 == 0.0
    inv = lax.rsqrt(jnp.where(zero, 1.0, mag2))          # EUP rsqrt
    amp = mag2 * inv                                      # |z|

    # Per-expert 1x1 conv as unrolled VPU broadcast-FMAs (K = C = 4 is far too
    # small for the MXU), then phase re-application.  torch.angle(0) == 0 so
    # structural zeros map to (cos, sin) = (1, 0).
    for e in range(E):
        we = w[e]                                         # (C, C)
        ae = we[:, 0:1] * amp[0:1, :]
        for c in range(1, C):
            ae = ae + we[:, c:c + 1] * amp[c:c + 1, :]    # (C, Mb)
        amp_ref[e] = ae                                   # leading-axis store
        sc = ae * inv                                     # amp_ext / |z|
        ore_ref[e] = jnp.where(zero, ae, sc * re)         # amp_ext * cos(phase)
        oim_ref[e] = jnp.where(zero, 0.0, sc * im)        # amp_ext * sin(phase)


def expert_fft_conv(re_f, im_f, w3, tile_m=2048):
    """re_f, im_f: (C, M) channel-major; w3: (E, C, C). Returns 3x (E, C, M)."""
    C, M = re_f.shape
    E = w3.shape[0]
    # Single full-width tile unless the pixel axis is big enough that a
    # "parallel" split pays for its ~600-cycle per-step overhead (and can be
    # sharded across TensorCores on v7x).
    Mb = tile_m if (M % tile_m == 0 and tile_m % 128 == 0) else M
    G = M // Mb
    spec_in = pl.BlockSpec((C, Mb), lambda i: (0, i))
    spec_w = pl.BlockSpec((E, C, C), lambda i: (0, 0, 0))
    spec_out = pl.BlockSpec((E, C, Mb), lambda i: (0, 0, i))
    return pl.pallas_call(
        _expert_fft_kernel,
        out_shape=(jax.ShapeDtypeStruct((E, C, M), jnp.float32),) * 3,
        grid=(G,),
        in_specs=[spec_in, spec_in, spec_w],
        out_specs=(spec_out, spec_out, spec_out),
        compiler_params=pltpu.CompilerParams(dimension_semantics=("parallel",)),
    )(re_f, im_f, w3)


# ---------------------------------------------------------------------------
# Kernel B: backbone conv1x1 (MXU) + ReLU + global-avg-pool per expert/sample,
#           gate pooling + softmax, expert mixture, all four heads fused into
#           one matmul.  Pooled features never hit HBM.
# ---------------------------------------------------------------------------
def backbone_gate_heads(recon_slab, x_flat, wb, bb, gw, gb, wh, bh, N):
    C, ENHW = recon_slab.shape
    NHW = x_flat.shape[1]
    HW = NHW // N
    E = gw.shape[0]
    F = wb.shape[0]
    P = wh.shape[0]
    assert ENHW == E * NHW

    def kernel(rec_ref, x_ref, wb_ref, bb_ref, gw_ref, gb_ref, wh_ref, bh_ref,
               out_ref, tw_ref):
        rec = rec_ref[...]            # (C, E*N*HW)
        xf = x_ref[...]               # (C, N*HW)
        wb_ = wb_ref[...]             # (F, C)
        bb_ = bb_ref[...]             # (F, 1)
        gw_ = gw_ref[...]             # (E, C)
        gb_ = gb_ref[...]             # (E, 1)

        # Shared backbone: 1x1 conv on the MXU over both experts' pixels at
        # once, bias + ReLU on the VPU.
        y = jnp.maximum(
            jnp.dot(wb_, rec, preferred_element_type=jnp.float32) + bb_, 0.0)

        # Global average pool per (expert, sample): lane-slice reduces (XLU).
        pooled = []                                      # E entries of (F, N)
        for e in range(E):
            cols = [jnp.mean(y[:, (e * N + n) * HW:(e * N + n + 1) * HW],
                             axis=1, keepdims=True) for n in range(N)]
            pooled.append(jnp.concatenate(cols, axis=1))

        # Gate: per-sample mean of x (in-kernel), linear, softmax over experts.
        xp = jnp.concatenate(
            [jnp.mean(xf[:, n * HW:(n + 1) * HW], axis=1, keepdims=True)
             for n in range(N)], axis=1)                 # (C, N)
        logits = gb_ + gw_[:, 0:1] * xp[0:1, :]
        for c in range(1, C):
            logits = logits + gw_[:, c:c + 1] * xp[c:c + 1, :]   # (E, N)
        m = jnp.max(logits, axis=0, keepdims=True)
        ex = jnp.exp(logits - m)
        tw = ex / jnp.sum(ex, axis=0, keepdims=True)             # (E, N)

        # Expert mixture (GRL is identity in the forward pass).
        feats = pooled[0] * tw[0:1, :]
        for e in range(1, E):
            feats = feats + pooled[e] * tw[e:e + 1, :]           # (F, N)

        # classifier / pseudo / adv_k / adv_d heads fused into a single matmul.
        out_ref[...] = jnp.dot(wh_ref[...], feats,
                               preferred_element_type=jnp.float32) + bh_ref[...]
        tw_ref[...] = tw

    out_shape = (jax.ShapeDtypeStruct((P, N), jnp.float32),
                 jax.ShapeDtypeStruct((E, N), jnp.float32))
    # Tiny problem: whole arrays fit comfortably in VMEM, no grid needed.
    return pl.pallas_call(kernel, out_shape=out_shape)(
        recon_slab, x_flat, wb, bb, gw, gb, wh, bh)


# ---------------------------------------------------------------------------
# Parameters (deterministic synthetic init) and full forward
# ---------------------------------------------------------------------------
def init_params(key, num_channels, out_channels, num_classes,
                num_experts=2, num_task=2):
    ks = jax.random.split(key, 12)
    s = 0.1
    nrm = lambda k, shp: (s * jax.random.normal(k, shp, jnp.float32))
    return dict(
        expert_w=nrm(ks[0], (num_experts, num_channels, num_channels)),  # 1x1 conv, no bias
        gate_w=nrm(ks[1], (num_task, num_experts, num_channels)),
        gate_b=nrm(ks[2], (num_task, num_experts)),
        backbone_w=nrm(ks[3], (out_channels, num_channels)),
        backbone_b=nrm(ks[4], (out_channels,)),
        cls_w=nrm(ks[5], (num_classes, out_channels)),
        cls_b=nrm(ks[6], (num_classes,)),
        pse_w=nrm(ks[7], (num_classes, out_channels)),
        pse_b=nrm(ks[8], (num_classes,)),
        advk_w=nrm(ks[9], (num_classes, out_channels)),
        advk_b=nrm(ks[10], (num_classes,)),
        advd_w=nrm(ks[11], (2, out_channels)),
        advd_b=jnp.zeros((2,), jnp.float32),
    )


def forward(x, task_ind, params):
    assert task_ind in (1, 2)
    N, C, H, W = x.shape
    M = N * H * W
    E = params["expert_w"].shape[0]
    F = params["backbone_w"].shape[0]
    K = params["cls_w"].shape[0]
    # NOTE: for N == 1 the PyTorch `.squeeze()` on experts_features would drop
    # the batch dim; we keep batched shapes (N > 1 in the reference usage).

    # Channel-major layout (C, N*H*W): one transpose of the real input,
    # everything downstream stays in this lane-dense layout.
    x_cm = jnp.transpose(x, (1, 0, 2, 3))                    # (C, N, H, W)
    x_flat = x_cm.reshape(C, M).astype(jnp.float32)
    # TODO(synk): FFT/IFFT have no Pallas primitive — fft2/ifft2 stay in the JAX wrapper.
    freq = jnp.fft.fft2(x_cm)                                # complex64, over (H, W)
    re_f = jnp.real(freq).reshape(C, M).astype(jnp.float32)
    im_f = jnp.imag(freq).reshape(C, M).astype(jnp.float32)

    amp, ore, oim = expert_fft_conv(re_f, im_f, params["expert_w"])  # (E, C, M) each

    # amplitude_features back to NCHW (the single layout-restoring transpose).
    amp_nchw = jnp.transpose(amp.reshape(E, C, N, H, W), (0, 2, 1, 3, 4))
    amplitude_features = [amp_nchw[e] for e in range(E)]

    recon = jnp.real(jnp.fft.ifft2(
        (ore + 1j * oim).reshape(E, C, N, H, W))).astype(jnp.float32)
    # (C, E*N*HW) slab: one MXU matmul handles both experts in Kernel B.
    recon_slab = jnp.transpose(recon, (1, 0, 2, 3, 4)).reshape(C, E * M)

    gi = task_ind - 1
    wh = jnp.concatenate([params["cls_w"], params["pse_w"],
                          params["advk_w"], params["advd_w"]], axis=0)   # (3K+2, F)
    bh = jnp.concatenate([params["cls_b"], params["pse_b"],
                          params["advk_b"], params["advd_b"]], axis=0).reshape(-1, 1)

    out_all, tw = backbone_gate_heads(
        recon_slab, x_flat,
        params["backbone_w"], params["backbone_b"].reshape(F, 1),
        params["gate_w"][gi], params["gate_b"][gi].reshape(E, 1),
        wh, bh, N)

    out_all = out_all.T                                      # (N, 3K+2)
    out = out_all[:, :K]
    out_pse = out_all[:, K:2 * K]
    out_adv_k = out_all[:, 2 * K:3 * K]
    out_adv_d = out_all[:, 3 * K:]
    task_weight = tw.T[:, None, :]                           # (N, 1, E)
    return amplitude_features, out, out_pse, out_adv_k, out_adv_d, task_weight


if __name__ == "__main__":
    N, C, H, W = 2, 4, 16, 16        # batch, backbone.in_channels, spatial
    OUT_CH = 32                      # backbone.out_channels
    NUM_CLASSES = 7

    x = jax.random.normal(jax.random.PRNGKey(0), (N, C, H, W), jnp.float32)
    params = init_params(jax.random.PRNGKey(42), C, OUT_CH, NUM_CLASSES)

    outs = forward(x, 1, params)
    jax.block_until_ready(outs)

    amp_feats, out, out_pse, out_adv_k, out_adv_d, task_weight = outs
    assert len(amp_feats) == 2 and amp_feats[0].shape == (N, C, H, W)
    assert out.shape == (N, NUM_CLASSES)
    assert out_pse.shape == (N, NUM_CLASSES)
    assert out_adv_k.shape == (N, NUM_CLASSES)
    assert out_adv_d.shape == (N, 2)
    assert task_weight.shape == (N, 1, 2)
    assert all(bool(jnp.all(jnp.isfinite(o))) for o in
               (out, out_pse, out_adv_k, out_adv_d, task_weight))
    print("KERNEL_OK")
</pallas_src>

<mosaic_0001>
module attributes {stable_mosaic.version = 11 : i64} {
  func.func @_expert_fft_kernel(%arg0: i32, %arg1: memref<4x512xf32, #tpu.memory_space<vmem>>, %arg2: memref<4x512xf32, #tpu.memory_space<vmem>>, %arg3: memref<2x4x4xf32, #tpu.memory_space<vmem>>, %arg4: memref<2x4x512xf32, #tpu.memory_space<vmem>>, %arg5: memref<2x4x512xf32, #tpu.memory_space<vmem>>, %arg6: memref<2x4x512xf32, #tpu.memory_space<vmem>>) attributes {dimension_semantics = [#tpu.dimension_semantics<parallel>], iteration_bounds = array<i64: 1>, scalar_prefetch = 0 : i64, scratch_operands = 0 : i64, tpu.core_type = #tpu.core_type<tc>, window_params = [{transform_indices = @transform_0, window_bounds = array<i64: 4, 512>}, {transform_indices = @transform_1, window_bounds = array<i64: 4, 512>}, {pipeline_mode = #tpu.pipeline_mode<synchronous>, transform_indices = @transform_2, window_bounds = array<i64: 2, 4, 4>}, {transform_indices = @transform_3, window_bounds = array<i64: 2, 4, 512>}, {transform_indices = @transform_4, window_bounds = array<i64: 2, 4, 512>}, {transform_indices = @transform_5, window_bounds = array<i64: 2, 4, 512>}]} {
    %c0 = arith.constant 0 : index
    %c0_0 = arith.constant 0 : index
    %0 = vector.load %arg1[%c0, %c0_0] : memref<4x512xf32, #tpu.memory_space<vmem>>, vector<4x512xf32>
    %c0_1 = arith.constant 0 : index
    %c0_2 = arith.constant 0 : index
    %1 = vector.load %arg2[%c0_1, %c0_2] : memref<4x512xf32, #tpu.memory_space<vmem>>, vector<4x512xf32>
    %c0_3 = arith.constant 0 : index
    %c0_4 = arith.constant 0 : index
    %c0_5 = arith.constant 0 : index
    %2 = vector.load %arg3[%c0_3, %c0_4, %c0_5] : memref<2x4x4xf32, #tpu.memory_space<vmem>>, vector<2x4x4xf32>
    %3 = arith.mulf %0, %0 : vector<4x512xf32>
    %4 = arith.mulf %1, %1 : vector<4x512xf32>
    %5 = arith.addf %3, %4 : vector<4x512xf32>
    %cst = arith.constant 0.000000e+00 : f32
    %6 = vector.broadcast %cst : f32 to vector<4x512xf32>
    %7 = arith.cmpf oeq, %5, %6 : vector<4x512xf32>
    %cst_6 = arith.constant 1.000000e+00 : f32
    %8 = vector.broadcast %cst_6 : f32 to vector<4x512xf32>
    %9 = arith.select %7, %8, %5 : vector<4x512xi1>, vector<4x512xf32>
    %10 = math.rsqrt %9 : vector<4x512xf32>
    %11 = arith.mulf %5, %10 : vector<4x512xf32>
    %12 = vector.extract_strided_slice %2 {offsets = [0, 0, 0], sizes = [1, 4, 4], strides = [1, 1, 1]} : vector<2x4x4xf32> to vector<1x4x4xf32>
    %13 = vector.shape_cast %12 : vector<1x4x4xf32> to vector<4x4xf32>
    %14 = vector.extract_strided_slice %13 {offsets = [0, 0], sizes = [4, 1], strides = [1, 1]} : vector<4x4xf32> to vector<4x1xf32>
    %15 = vector.extract_strided_slice %11 {offsets = [0, 0], sizes = [1, 512], strides = [1, 1]} : vector<4x512xf32> to vector<1x512xf32>
    %16 = vector.broadcast %14 : vector<4x1xf32> to vector<4x512xf32>
    %17 = vector.broadcast %15 : vector<1x512xf32> to vector<4x512xf32>
    %18 = arith.mulf %16, %17 : vector<4x512xf32>
    %19 = vector.extract_strided_slice %13 {offsets = [0, 1], sizes = [4, 1], strides = [1, 1]} : vector<4x4xf32> to vector<4x1xf32>
    %20 = vector.extract_strided_slice %11 {offsets = [1, 0], sizes = [1, 512], strides = [1, 1]} : vector<4x512xf32> to vector<1x512xf32>
    %21 = vector.broadcast %19 : vector<4x1xf32> to vector<4x512xf32>
    %22 = vector.broadcast %20 : vector<1x512xf32> to vector<4x512xf32>
    %23 = arith.mulf %21, %22 : vector<4x512xf32>
    %24 = arith.addf %18, %23 : vector<4x512xf32>
    %25 = vector.extract_strided_slice %13 {offsets = [0, 2], sizes = [4, 1], strides = [1, 1]} : vector<4x4xf32> to vector<4x1xf32>
    %26 = vector.extract_strided_slice %11 {offsets = [2, 0], sizes = [1, 512], strides = [1, 1]} : vector<4x512xf32> to vector<1x512xf32>
    %27 = vector.broadcast %25 : vector<4x1xf32> to vector<4x512xf32>
    %28 = vector.broadcast %26 : vector<1x512xf32> to vector<4x512xf32>
    %29 = arith.mulf %27, %28 : vector<4x512xf32>
    %30 = arith.addf %24, %29 : vector<4x512xf32>
    %31 = vector.extract_strided_slice %13 {offsets = [0, 3], sizes = [4, 1], strides = [1, 1]} : vector<4x4xf32> to vector<4x1xf32>
    %32 = vector.extract_strided_slice %11 {offsets = [3, 0], sizes = [1, 512], strides = [1, 1]} : vector<4x512xf32> to vector<1x512xf32>
    %33 = vector.broadcast %31 : vector<4x1xf32> to vector<4x512xf32>
    %34 = vector.broadcast %32 : vector<1x512xf32> to vector<4x512xf32>
    %35 = arith.mulf %33, %34 : vector<4x512xf32>
    %36 = arith.addf %30, %35 : vector<4x512xf32>
    %c0_7 = arith.constant 0 : index
    %c0_8 = arith.constant 0 : index
    %c0_9 = arith.constant 0 : index
    %37 = vector.load %arg4[%c0_7, %c0_8, %c0_9] : memref<2x4x512xf32, #tpu.memory_space<vmem>>, vector<1x4x512xf32>
    %38 = vector.shape_cast %37 : vector<1x4x512xf32> to vector<4x512xf32>
    %39 = vector.shape_cast %36 : vector<4x512xf32> to vector<1x4x512xf32>
    tpu.vector_store %arg4[%c0_7, %c0_8, %c0_9], %39 {strides = array<i32>} : memref<2x4x512xf32, #tpu.memory_space<vmem>>, vector<1x4x512xf32>,
    %40 = arith.mulf %36, %10 : vector<4x512xf32>
    %41 = arith.mulf %40, %0 : vector<4x512xf32>
    %42 = arith.select %7, %36, %41 : vector<4x512xi1>, vector<4x512xf32>
    %c0_10 = arith.constant 0 : index
    %c0_11 = arith.constant 0 : index
    %c0_12 = arith.constant 0 : index
    %43 = vector.load %arg5[%c0_10, %c0_11, %c0_12] : memref<2x4x512xf32, #tpu.memory_space<vmem>>, vector<1x4x512xf32>
    %44 = vector.shape_cast %43 : vector<1x4x512xf32> to vector<4x512xf32>
    %45 = vector.shape_cast %42 : vector<4x512xf32> to vector<1x4x512xf32>
    tpu.vector_store %arg5[%c0_10, %c0_11, %c0_12], %45 {strides = array<i32>} : memref<2x4x512xf32, #tpu.memory_space<vmem>>, vector<1x4x512xf32>,
    %46 = arith.mulf %40, %1 : vector<4x512xf32>
    %cst_13 = arith.constant 0.000000e+00 : f32
    %47 = vector.broadcast %cst_13 : f32 to vector<4x512xf32>
    %48 = arith.select %7, %47, %46 : vector<4x512xi1>, vector<4x512xf32>
    %c0_14 = arith.constant 0 : index
    %c0_15 = arith.constant 0 : index
    %c0_16 = arith.constant 0 : index
    %49 = vector.load %arg6[%c0_14, %c0_15, %c0_16] : memref<2x4x512xf32, #tpu.memory_space<vmem>>, vector<1x4x512xf32>
    %50 = vector.shape_cast %49 : vector<1x4x512xf32> to vector<4x512xf32>
    %51 = vector.shape_cast %48 : vector<4x512xf32> to vector<1x4x512xf32>
    tpu.vector_store %arg6[%c0_14, %c0_15, %c0_16], %51 {strides = array<i32>} : memref<2x4x512xf32, #tpu.memory_space<vmem>>, vector<1x4x512xf32>,
    %52 = vector.extract_strided_slice %2 {offsets = [1, 0, 0], sizes = [1, 4, 4], strides = [1, 1, 1]} : vector<2x4x4xf32> to vector<1x4x4xf32>
    %53 = vector.shape_cast %52 : vector<1x4x4xf32> to vector<4x4xf32>
    %54 = vector.extract_strided_slice %53 {offsets = [0, 0], sizes = [4, 1], strides = [1, 1]} : vector<4x4xf32> to vector<4x1xf32>
    %55 = vector.extract_strided_slice %11 {offsets = [0, 0], sizes = [1, 512], strides = [1, 1]} : vector<4x512xf32> to vector<1x512xf32>
    %56 = vector.broadcast %54 : vector<4x1xf32> to vector<4x512xf32>
    %57 = vector.broadcast %55 : vector<1x512xf32> to vector<4x512xf32>
    %58 = arith.mulf %56, %57 : vector<4x512xf32>
    %59 = vector.extract_strided_slice %53 {offsets = [0, 1], sizes = [4, 1], strides = [1, 1]} : vector<4x4xf32> to vector<4x1xf32>
    %60 = vector.extract_strided_slice %11 {offsets = [1, 0], sizes = [1, 512], strides = [1, 1]} : vector<4x512xf32> to vector<1x512xf32>
    %61 = vector.broadcast %59 : vector<4x1xf32> to vector<4x512xf32>
    %62 = vector.broadcast %60 : vector<1x512xf32> to vector<4x512xf32>
    %63 = arith.mulf %61, %62 : vector<4x512xf32>
    %64 = arith.addf %58, %63 : vector<4x512xf32>
    %65 = vector.extract_strided_slice %53 {offsets = [0, 2], sizes = [4, 1], strides = [1, 1]} : vector<4x4xf32> to vector<4x1xf32>
    %66 = vector.extract_strided_slice %11 {offsets = [2, 0], sizes = [1, 512], strides = [1, 1]} : vector<4x512xf32> to vector<1x512xf32>
    %67 = vector.broadcast %65 : vector<4x1xf32> to vector<4x512xf32>
    %68 = vector.broadcast %66 : vector<1x512xf32> to vector<4x512xf32>
    %69 = arith.mulf %67, %68 : vector<4x512xf32>
    %70 = arith.addf %64, %69 : vector<4x512xf32>
    %71 = vector.extract_strided_slice %53 {offsets = [0, 3], sizes = [4, 1], strides = [1, 1]} : vector<4x4xf32> to vector<4x1xf32>
    %72 = vector.extract_strided_slice %11 {offsets = [3, 0], sizes = [1, 512], strides = [1, 1]} : vector<4x512xf32> to vector<1x512xf32>
    %73 = vector.broadcast %71 : vector<4x1xf32> to vector<4x512xf32>
    %74 = vector.broadcast %72 : vector<1x512xf32> to vector<4x512xf32>
    %75 = arith.mulf %73, %74 : vector<4x512xf32>
    %76 = arith.addf %70, %75 : vector<4x512xf32>
    %c1 = arith.constant 1 : index
    %c0_17 = arith.constant 0 : index
    %c0_18 = arith.constant 0 : index
    %77 = vector.load %arg4[%c1, %c0_17, %c0_18] : memref<2x4x512xf32, #tpu.memory_space<vmem>>, vector<1x4x512xf32>
    %78 = vector.shape_cast %77 : vector<1x4x512xf32> to vector<4x512xf32>
    %79 = vector.shape_cast %76 : vector<4x512xf32> to vector<1x4x512xf32>
    tpu.vector_store %arg4[%c1, %c0_17, %c0_18], %79 {strides = array<i32>} : memref<2x4x512xf32, #tpu.memory_space<vmem>>, vector<1x4x512xf32>,
    %80 = arith.mulf %76, %10 : vector<4x512xf32>
    %81 = arith.mulf %80, %0 : vector<4x512xf32>
    %82 = arith.select %7, %76, %81 : vector<4x512xi1>, vector<4x512xf32>
    %c1_19 = arith.constant 1 : index
    %c0_20 = arith.constant 0 : index
    %c0_21 = arith.constant 0 : index
    %83 = vector.load %arg5[%c1_19, %c0_20, %c0_21] : memref<2x4x512xf32, #tpu.memory_space<vmem>>, vector<1x4x512xf32>
    %84 = vector.shape_cast %83 : vector<1x4x512xf32> to vector<4x512xf32>
    %85 = vector.shape_cast %82 : vector<4x512xf32> to vector<1x4x512xf32>
    tpu.vector_store %arg5[%c1_19, %c0_20, %c0_21], %85 {strides = array<i32>} : memref<2x4x512xf32, #tpu.memory_space<vmem>>, vector<1x4x512xf32>,
    %86 = arith.mulf %80, %1 : vector<4x512xf32>
    %cst_22 = arith.constant 0.000000e+00 : f32
    %87 = vector.broadcast %cst_22 : f32 to vector<4x512xf32>
    %88 = arith.select %7, %87, %86 : vector<4x512xi1>, vector<4x512xf32>
    %c1_23 = arith.constant 1 : index
    %c0_24 = arith.constant 0 : index
    %c0_25 = arith.constant 0 : index
    %89 = vector.load %arg6[%c1_23, %c0_24, %c0_25] : memref<2x4x512xf32, #tpu.memory_space<vmem>>, vector<1x4x512xf32>
    %90 = vector.shape_cast %89 : vector<1x4x512xf32> to vector<4x512xf32>
    %91 = vector.shape_cast %88 : vector<4x512xf32> to vector<1x4x512xf32>
    tpu.vector_store %arg6[%c1_23, %c0_24, %c0_25], %91 {strides = array<i32>} : memref<2x4x512xf32, #tpu.memory_space<vmem>>, vector<1x4x512xf32>,
    return
  }
  func.func @transform_0(%arg0: i32) -> (i32, i32) {
    %c0_i32 = arith.constant 0 : i32
    %c0_i32_0 = arith.constant 0 : i32
    return %c0_i32, %arg0 : i32, i32
  }
  func.func @transform_1(%arg0: i32) -> (i32, i32) {
    %c0_i32 = arith.constant 0 : i32
    %c0_i32_0 = arith.constant 0 : i32
    return %c0_i32, %arg0 : i32, i32
  }
  func.func @transform_2(%arg0: i32) -> (i32, i32, i32) {
    %c0_i32 = arith.constant 0 : i32
    %c0_i32_0 = arith.constant 0 : i32
    %c0_i32_1 = arith.constant 0 : i32
    %c0_i32_2 = arith.constant 0 : i32
    return %c0_i32, %c0_i32_0, %c0_i32_1 : i32, i32, i32
  }
  func.func @transform_3(%arg0: i32) -> (i32, i32, i32) {
    %c0_i32 = arith.constant 0 : i32
    %c0_i32_0 = arith.constant 0 : i32
    %c0_i32_1 = arith.constant 0 : i32
    return %c0_i32, %c0_i32_0, %arg0 : i32, i32, i32
  }
  func.func @transform_4(%arg0: i32) -> (i32, i32, i32) {
    %c0_i32 = arith.constant 0 : i32
    %c0_i32_0 = arith.constant 0 : i32
    %c0_i32_1 = arith.constant 0 : i32
    return %c0_i32, %c0_i32_0, %arg0 : i32, i32, i32
  }
  func.func @transform_5(%arg0: i32) -> (i32, i32, i32) {
    %c0_i32 = arith.constant 0 : i32
    %c0_i32_0 = arith.constant 0 : i32
    %c0_i32_1 = arith.constant 0 : i32
    return %c0_i32, %c0_i32_0, %arg0 : i32, i32, i32
  }
}

</mosaic_0001>

<llo_original>
// kernel: tpu_custom_call.1
$region0: #{tpu_custom_call.1}
  #allocation0 [shape = 'u32[]', space=smem, size = 0x4, offset = 0x4, fixed_abs, tag = 'smem constant byte address 0x4 - core index']
  #allocation1 [shape = 'u32[144,128]{1,0:T(1,128)}', space=vmem, size = 0x12000, scoped, tag = 'internal scratch']
  %s0 = inlined_call_operand.hbm [shape: f32[4,512], index: 0, kind: input, shape index: {}]
  %s1 = inlined_call_operand.hbm [shape: f32[4,512], index: 1, kind: input, shape index: {}]
  %s2 = inlined_call_operand.hbm [shape: f32[2,4,4], index: 2, kind: input, shape index: {}]
  %s3 = inlined_call_operand.hbm [shape: f32[2,4,512], index: 3, kind: output, shape index: {0}]
  %s4 = inlined_call_operand.hbm [shape: f32[2,4,512], index: 4, kind: output, shape index: {1}]
  %s5 = inlined_call_operand.hbm [shape: f32[2,4,512], index: 5, kind: output, shape index: {2}]
  %6 = xla_tuple %s3, %s4, %s5
  %s7 = sld [smem:[#allocation0]]
  $region50: #{tpu_custom_call.1} parent=0
    _
  %s9 = ssub.s32 1, %s7
  %s10 = scalar_select 0, %s9, %s7
  $region1: #{tpu_custom_call.1} parent=0
    #allocation2 [shape = 'u8[8192]{0}', space=vmem, size = 0x2000, scoped, tag = 'input window, operand 0, single buffered']
    #allocation3 [shape = 's32[1]{0}', space=sflag, size = 0x4, scoped, tag = 'scoped memory for tpu_custom_call.1']
    #allocation4 [shape = 's32[1]{0}', space=sflag, size = 0x4, scoped, tag = 'scoped memory for tpu_custom_call.1']
    #allocation5 [shape = 'u8[8192]{0}', space=vmem, size = 0x2000, scoped, tag = 'input window, operand 1, single buffered']
    #allocation6 [shape = 's32[1]{0}', space=sflag, size = 0x4, scoped, tag = 'scoped memory for tpu_custom_call.1']
    #allocation7 [shape = 'u8[4096]{0}', space=vmem, size = 0x1000, scoped, tag = 'input window, operand 2, single buffered']
    #allocation8 [shape = 'u8[16384]{0}', space=vmem, size = 0x4000, scoped, tag = 'output window, operand 0, single buffered']
    #allocation9 [shape = 'u8[16384]{0}', space=vmem, size = 0x4000, scoped, tag = 'output window, operand 1, single buffered']
    #allocation10 [shape = 's32[1]{0}', space=sflag, size = 0x4, scoped, tag = 'scoped memory for tpu_custom_call.1']
    #allocation11 [shape = 'u8[16384]{0}', space=vmem, size = 0x4000, scoped, tag = 'output window, operand 2, single buffered']
    %11 = vsyncpa [#allocation3], 0
    %12 = vsyncpa [#allocation6], 0
    %13 = vsyncpa [#allocation4], 0
    %14 = vsyncpa [#allocation10], 0
    // Predicated region
    $region2: #{tpu_custom_call.1} parent=1 // pred_check
      _
    $region3: #{tpu_custom_call.1} parent=1 // pred_check_branch
      %16 = sbr.rel (0) target = $region5
    $region4: #{tpu_custom_call.1} parent=1 // pred_region
      %s18 = ssub.s32 256, 256
      %19 = vsyncadd [#allocation3], %s18
      %s21 = sshll.u32 [#allocation2], 4
      %s22 = int_to_ptr.vmem [resolvable:$true] %s21
      %24 = dma.hbm_to_vmem [thread:$0]  %s0, 256, %s22, [#allocation3]
    $region5: #{tpu_custom_call.1} parent=1 // pred_fallthru
      _
    // Predicated region
    $region6: #{tpu_custom_call.1} parent=1 // pred_check
      _
    $region7: #{tpu_custom_call.1} parent=1 // pred_check_branch
      %26 = sbr.rel (0) target = $region9
    $region8: #{tpu_custom_call.1} parent=1 // pred_region
      %s28 = ssub.s32 256, 256
      %29 = vsyncadd [#allocation6], %s28
      %s31 = sshll.u32 [#allocation5], 4
      %s32 = int_to_ptr.vmem [resolvable:$true] %s31
      %34 = dma.hbm_to_vmem [thread:$0]  %s1, 256, %s32, [#allocation6]
    $region9: #{tpu_custom_call.1} parent=1 // pred_fallthru
      _
    // Predicated region
    $region10: #{tpu_custom_call.1} parent=1 // pred_check
      _
    $region11: #{tpu_custom_call.1} parent=1 // pred_check_branch
      %36 = sbr.rel (0) target = $region13
    $region12: #{tpu_custom_call.1} parent=1 // pred_region
      %s38 = ssub.s32 128, 128
      %39 = vsyncadd [#allocation6], %s38
      %s40 = sshll.u32 [#allocation7], 4
      %s41 = int_to_ptr.vmem [resolvable:$true] %s40
      %46 = dma.hbm_to_vmem [thread:$0]  %s2, 128, %s41, [#allocation6], 64, 64, 4
    $region13: #{tpu_custom_call.1} parent=1 // pred_fallthru
      _
    // Predicated region
    $region14: #{tpu_custom_call.1} parent=1 // pred_check
      _
    $region15: #{tpu_custom_call.1} parent=1 // pred_check_branch
      %48 = sbr.rel (0) target = $region17
    $region16: #{tpu_custom_call.1} parent=1 // pred_region
      %49 = dma.done [#allocation3], 256
    $region17: #{tpu_custom_call.1} parent=1 // pred_fallthru
      _
    // Predicated region
    $region18: #{tpu_custom_call.1} parent=1 // pred_check
      _
    $region19: #{tpu_custom_call.1} parent=1 // pred_check_branch
      %51 = sbr.rel (0) target = $region21
    $region20: #{tpu_custom_call.1} parent=1 // pred_region
      %52 = dma.done [#allocation6], 256
    $region21: #{tpu_custom_call.1} parent=1 // pred_fallthru
      _
    // Predicated region
    $region22: #{tpu_custom_call.1} parent=1 // pred_check
      _
    $region23: #{tpu_custom_call.1} parent=1 // pred_check_branch
      %54 = sbr.rel (0) target = $region25
    $region24: #{tpu_custom_call.1} parent=1 // pred_region
      %55 = dma.done [#allocation6], 128
    $region25: #{tpu_custom_call.1} parent=1 // pred_fallthru
      _
    %v56 = vld [vmem:[#allocation2] sm:$0xff]
    %v57 = vld [vmem:[#allocation2 + $0x8] sm:$0xff]
    %v58 = vld [vmem:[#allocation5] sm:$0xff]
    %v59 = vld [vmem:[#allocation5 + $0x8] sm:$0xff]
    %v60 = vld [vmem:[#allocation7] sm:$0xf]
    %v61 = vld [vmem:[#allocation7 + $0x4] sm:$0xf]
    %v62 = vmul.f32 %v56, %v56
    %v63 = vmul.f32 %v57, %v57
    %v64 = vmul.f32 %v58, %v58
    %v65 = vmul.f32 %v59, %v59
    %v66 = vadd.f32 %v62, %v64
    %v67 = vadd.f32 %v63, %v65
    %vm68 = vcmp.eq.f32.partialorder %v66, 0.0
    %vm69 = vcmp.eq.f32.partialorder %v67, 0.0
    %v70 = vsel %vm68, 1.0, %v66
    %v71 = vsel %vm69, 1.0, %v67
    %v72 = vrsqrt.pop %v70
    %v73 = vrsqrt.pop %v71
    %v74 = vmul.f32 %v66, %v72
    %v75 = vmul.f32 %v67, %v73
    %77 = vset.pattern.permute.xlu0 0
    %78 = vperm.xlu0 %77, %v60
    %v79 = vpop.permute.xlu0 %78
    %v83 = vlaneseq
    %v84 = vshrl.u32 %v83, 7
    %v85 = vsub.s32 0, %v84
    %v86 = vrot.slane %v74, %v85
    %v87 = vlaneseq
    %v88 = vshrl.u32 %v87, 7
    %v89 = vsub.s32 4, %v88
    %v90 = vrot.slane %v74, %v89
    %v91 = vlaneseq
    %v92 = vshrl.u32 %v91, 7
    %v93 = vsub.s32 0, %v92
    %v94 = vrot.slane %v75, %v93
    %v95 = vlaneseq
    %v96 = vshrl.u32 %v95, 7
    %v97 = vsub.s32 4, %v96
    %v98 = vrot.slane %v75, %v97
    %v103 = vlaneseq
    %v104 = vshrl.u32 %v103, 7
    %v105 = vsub.s32 0, %v104
    %v106 = vrot.slane %v86, %v105
    %v107 = vlaneseq
    %v108 = vshrl.u32 %v107, 7
    %v109 = vsub.s32 0, %v108
    %v110 = vrot.slane %v90, %v109
    %v111 = vlaneseq
    %v112 = vshrl.u32 %v111, 7
    %v113 = vsub.s32 0, %v112
    %v114 = vrot.slane %v94, %v113
    %v115 = vlaneseq
    %v116 = vshrl.u32 %v115, 7
    %v117 = vsub.s32 0, %v116
    %v118 = vrot.slane %v98, %v117
    %v119 = vmul.f32 %v79, %v106
    %v120 = vmul.f32 %v79, %v110
    %v121 = vmul.f32 %v79, %v114
    %v122 = vmul.f32 %v79, %v118
    %123 = vset.pattern.permute.xlu0 1
    %124 = vperm.xlu0 %123, %v60
    %v125 = vpop.permute.xlu0 %124
    %v127 = vlaneseq
    %v128 = vshrl.u32 %v127, 7
    %v129 = vsub.s32 1, %v128
    %v130 = vrot.slane %v74, %v129
    %v131 = vlaneseq
    %v132 = vshrl.u32 %v131, 7
    %v133 = vsub.s32 5, %v132
    %v134 = vrot.slane %v74, %v133
    %v135 = vlaneseq
    %v136 = vshrl.u32 %v135, 7
    %v137 = vsub.s32 1, %v136
    %v138 = vrot.slane %v75, %v137
    %v139 = vlaneseq
    %v140 = vshrl.u32 %v139, 7
    %v141 = vsub.s32 5, %v140
    %v142 = vrot.slane %v75, %v141
    %v147 = vlaneseq
    %v148 = vshrl.u32 %v147, 7
    %v149 = vsub.s32 1, %v148
    %v150 = vrot.slane %v130, %v149
    %v151 = vlaneseq
    %v152 = vshrl.u32 %v151, 7
    %v153 = vsub.s32 1, %v152
    %v154 = vrot.slane %v134, %v153
    %v155 = vlaneseq
    %v156 = vshrl.u32 %v155, 7
    %v157 = vsub.s32 1, %v156
    %v158 = vrot.slane %v138, %v157
    %v159 = vlaneseq
    %v160 = vshrl.u32 %v159, 7
    %v161 = vsub.s32 1, %v160
    %v162 = vrot.slane %v142, %v161
    %v163 = vmul.f32 %v125, %v150
    %v164 = vmul.f32 %v125, %v154
    %v165 = vmul.f32 %v125, %v158
    %v166 = vmul.f32 %v125, %v162
    %v167 = vadd.f32 %v119, %v163
    %v168 = vadd.f32 %v120, %v164
    %v169 = vadd.f32 %v121, %v165
    %v170 = vadd.f32 %v122, %v166
    %171 = vset.pattern.permute.xlu0 2
    %172 = vperm.xlu0 %171, %v60
    %v173 = vpop.permute.xlu0 %172
    %v175 = vlaneseq
    %v176 = vshrl.u32 %v175, 7
    %v177 = vsub.s32 2, %v176
    %v178 = vrot.slane %v74, %v177
    %v179 = vlaneseq
    %v180 = vshrl.u32 %v179, 7
    %v181 = vsub.s32 6, %v180
    %v182 = vrot.slane %v74, %v181
    %v183 = vlaneseq
    %v184 = vshrl.u32 %v183, 7
    %v185 = vsub.s32 2, %v184
    %v186 = vrot.slane %v75, %v185
    %v187 = vlaneseq
    %v188 = vshrl.u32 %v187, 7
    %v189 = vsub.s32 6, %v188
    %v190 = vrot.slane %v75, %v189
    %v195 = vlaneseq
    %v196 = vshrl.u32 %v195, 7
    %v197 = vsub.s32 2, %v196
    %v198 = vrot.slane %v178, %v197
    %v199 = vlaneseq
    %v200 = vshrl.u32 %v199, 7
    %v201 = vsub.s32 2, %v200
    %v202 = vrot.slane %v182, %v201
    %v203 = vlaneseq
    %v204 = vshrl.u32 %v203, 7
    %v205 = vsub.s32 2, %v204
    %v206 = vrot.slane %v186, %v205
    %v207 = vlaneseq
    %v208 = vshrl.u32 %v207, 7
    %v209 = vsub.s32 2, %v208
    %v210 = vrot.slane %v190, %v209
    %v211 = vmul.f32 %v173, %v198
    %v212 = vmul.f32 %v173, %v202
    %v213 = vmul.f32 %v173, %v206
    %v214 = vmul.f32 %v173, %v210
    %v215 = vadd.f32 %v167, %v211
    %v216 = vadd.f32 %v168, %v212
    %v217 = vadd.f32 %v169, %v213
    %v218 = vadd.f32 %v170, %v214
    %219 = vset.pattern.permute.xlu0 3
    %220 = vperm.xlu0 %219, %v60
    %v221 = vpop.permute.xlu0 %220
    %v223 = vlaneseq
    %v224 = vshrl.u32 %v223, 7
    %v225 = vsub.s32 3, %v224
    %v226 = vrot.slane %v74, %v225
    %v227 = vlaneseq
    %v228 = vshrl.u32 %v227, 7
    %v229 = vsub.s32 7, %v228
    %v230 = vrot.slane %v74, %v229
    %v231 = vlaneseq
    %v232 = vshrl.u32 %v231, 7
    %v233 = vsub.s32 3, %v232
    %v234 = vrot.slane %v75, %v233
    %v235 = vlaneseq
    %v236 = vshrl.u32 %v235, 7
    %v237 = vsub.s32 7, %v236
    %v238 = vrot.slane %v75, %v237
    %v243 = vlaneseq
    %v244 = vshrl.u32 %v243, 7
    %v245 = vsub.s32 3, %v244
    %v246 = vrot.slane %v226, %v245
    %v247 = vlaneseq
    %v248 = vshrl.u32 %v247, 7
    %v249 = vsub.s32 3, %v248
    %v250 = vrot.slane %v230, %v249
    %v251 = vlaneseq
    %v252 = vshrl.u32 %v251, 7
    %v253 = vsub.s32 3, %v252
    %v254 = vrot.slane %v234, %v253
    %v255 = vlaneseq
    %v256 = vshrl.u32 %v255, 7
    %v257 = vsub.s32 3, %v256
    %v258 = vrot.slane %v238, %v257
    %v259 = vmul.f32 %v221, %v246
    %v260 = vmul.f32 %v221, %v250
    %v261 = vmul.f32 %v221, %v254
    %v262 = vmul.f32 %v221, %v258
    %v263 = vadd.f32 %v215, %v259
    %v264 = vadd.f32 %v216, %v260
    %v265 = vadd.f32 %v217, %v261
    %v266 = vadd.f32 %v218, %v262
    %v271 = vcombine.low %v263, %v264
    %v272 = vcombine.low %v265, %v266
    %275 = vst [vmem:[#allocation8] sm:$0xff] %v271
    %276 = vst [vmem:[#allocation8 + $0x8] sm:$0xff] %v272
    %v279 = vcombine.high %v72, %v72
    %v280 = vcombine.high %v73, %v73
    %v283 = vmul.f32 %v263, %v72
    %v284 = vmul.f32 %v264, %v279
    %v285 = vmul.f32 %v265, %v73
    %v286 = vmul.f32 %v266, %v280
    %v289 = vcombine.high %v56, %v56
    %v290 = vcombine.high %v57, %v57
    %v293 = vmul.f32 %v283, %v56
    %v294 = vmul.f32 %v284, %v289
    %v295 = vmul.f32 %v285, %v57
    %v296 = vmul.f32 %v286, %v290
    %v301 = vcombine.low %v293, %v294
    %v302 = vcombine.low %v295, %v296
    %v305 = vsel %vm68, %v271, %v301
    %v306 = vsel %vm69, %v272, %v302
    %307 = vst [vmem:[#allocation9] sm:$0xff] %v305
    %308 = vst [vmem:[#allocation9 + $0x8] sm:$0xff] %v306
    %v311 = vcombine.high %v58, %v58
    %v312 = vcombine.high %v59, %v59
    %v315 = vmul.f32 %v283, %v58
    %v316 = vmul.f32 %v284, %v311
    %v317 = vmul.f32 %v285, %v59
    %v318 = vmul.f32 %v286, %v312
    %v323 = vcombine.low %v315, %v316
    %v324 = vcombine.low %v317, %v318
    %v327 = vsel %vm68, 0.0, %v323
    %v328 = vsel %vm69, 0.0, %v324
    %329 = vst [vmem:[#allocation11] sm:$0xff] %v327
    %330 = vst [vmem:[#allocation11 + $0x8] sm:$0xff] %v328
    %332 = vset.pattern.permute.xlu0 0
    %333 = vperm.xlu0 %332, %v61
    %v334 = vpop.permute.xlu0 %333
    %v336 = vmul.f32 %v334, %v106
    %v337 = vmul.f32 %v334, %v110
    %v338 = vmul.f32 %v334, %v114
    %v339 = vmul.f32 %v334, %v118
    %340 = vset.pattern.permute.xlu0 1
    %341 = vperm.xlu0 %340, %v61
    %v342 = vpop.permute.xlu0 %341
    %v344 = vmul.f32 %v342, %v150
    %v345 = vmul.f32 %v342, %v154
    %v346 = vmul.f32 %v342, %v158
    %v347 = vmul.f32 %v342, %v162
    %v348 = vadd.f32 %v336, %v344
    %v349 = vadd.f32 %v337, %v345
    %v350 = vadd.f32 %v338, %v346
    %v351 = vadd.f32 %v339, %v347
    %352 = vset.pattern.permute.xlu0 2
    %353 = vperm.xlu0 %352, %v61
    %v354 = vpop.permute.xlu0 %353
    %v356 = vmul.f32 %v354, %v198
    %v357 = vmul.f32 %v354, %v202
    %v358 = vmul.f32 %v354, %v206
    %v359 = vmul.f32 %v354, %v210
    %v360 = vadd.f32 %v348, %v356
    %v361 = vadd.f32 %v349, %v357
    %v362 = vadd.f32 %v350, %v358
    %v363 = vadd.f32 %v351, %v359
    %364 = vset.pattern.permute.xlu0 3
    %365 = vperm.xlu0 %364, %v61
    %v366 = vpop.permute.xlu0 %365
    %v368 = vmul.f32 %v366, %v246
    %v369 = vmul.f32 %v366, %v250
    %v370 = vmul.f32 %v366, %v254
    %v371 = vmul.f32 %v366, %v258
    %v372 = vadd.f32 %v360, %v368
    %v373 = vadd.f32 %v361, %v369
    %v374 = vadd.f32 %v362, %v370
    %v375 = vadd.f32 %v363, %v371
    %v380 = vcombine.low %v372, %v373
    %v381 = vcombine.low %v374, %v375
    %s384 = scalar_lea.vmem [#allocation8], 16
    %385 = vst [vmem:[%s384] sm:$0xff] %v380
    %386 = vst [vmem:[%s384 + $0x8] sm:$0xff] %v381
    %v387 = vmul.f32 %v372, %v72
    %v388 = vmul.f32 %v373, %v279
    %v389 = vmul.f32 %v374, %v73
    %v390 = vmul.f32 %v375, %v280
    %v391 = vmul.f32 %v387, %v56
    %v392 = vmul.f32 %v388, %v289
    %v393 = vmul.f32 %v389, %v57
    %v394 = vmul.f32 %v390, %v290
    %v399 = vcombine.low %v391, %v392
    %v400 = vcombine.low %v393, %v394
    %v403 = vsel %vm68, %v380, %v399
    %v404 = vsel %vm69, %v381, %v400
    %s405 = scalar_lea.vmem [#allocation9], 16
    %406 = vst [vmem:[%s405] sm:$0xff] %v403
    %407 = vst [vmem:[%s405 + $0x8] sm:$0xff] %v404
    %v408 = vmul.f32 %v387, %v58
    %v409 = vmul.f32 %v388, %v311
    %v410 = vmul.f32 %v389, %v59
    %v411 = vmul.f32 %v390, %v312
    %v416 = vcombine.low %v408, %v409
    %v417 = vcombine.low %v410, %v411
    %v420 = vsel %vm68, 0.0, %v416
    %v421 = vsel %vm69, 0.0, %v417
    %s422 = scalar_lea.vmem [#allocation11], 16
    %423 = vst [vmem:[%s422] sm:$0xff] %v420
    %424 = vst [vmem:[%s422 + $0x8] sm:$0xff] %v421
    // Predicated region
    $region26: #{tpu_custom_call.1} parent=1 // pred_check
      _
    $region27: #{tpu_custom_call.1} parent=1 // pred_check_branch
      %426 = sbr.rel (0) target = $region29
    $region28: #{tpu_custom_call.1} parent=1 // pred_region
      %s428 = ssub.s32 512, 512
      %429 = vsyncadd [#allocation4], %s428
      %s430 = sshll.u32 [#allocation8], 4
      %s431 = int_to_ptr.vmem [resolvable:$true] %s430
      %436 = dma.vmem_to_hbm [thread:$0]  %s431, 512, %s3, [#allocation4], 256, 256, 16
    $region29: #{tpu_custom_call.1} parent=1 // pred_fallthru
      _
    // Predicated region
    $region30: #{tpu_custom_call.1} parent=1 // pred_check
      _
    $region31: #{tpu_custom_call.1} parent=1 // pred_check_branch
      %438 = sbr.rel (0) target = $region33
    $region32: #{tpu_custom_call.1} parent=1 // pred_region
      %s440 = ssub.s32 512, 512
      %441 = vsyncadd [#allocation10], %s440
      %s442 = sshll.u32 [#allocation9], 4
      %s443 = int_to_ptr.vmem [resolvable:$true] %s442
      %448 = dma.vmem_to_hbm [thread:$0]  %s443, 512, %s4, [#allocation10], 256, 256, 16
    $region33: #{tpu_custom_call.1} parent=1 // pred_fallthru
      _
    // Predicated region
    $region34: #{tpu_custom_call.1} parent=1 // pred_check
      _
    $region35: #{tpu_custom_call.1} parent=1 // pred_check_branch
      %450 = sbr.rel (0) target = $region37
    $region36: #{tpu_custom_call.1} parent=1 // pred_region
      %s452 = ssub.s32 512, 512
      %453 = vsyncadd [#allocation10], %s452
      %s454 = sshll.u32 [#allocation11], 4
      %s455 = int_to_ptr.vmem [resolvable:$true] %s454
      %460 = dma.vmem_to_hbm [thread:$0]  %s455, 512, %s5, [#allocation10], 256, 256, 16
    $region37: #{tpu_custom_call.1} parent=1 // pred_fallthru
      _
    // Predicated region
    $region38: #{tpu_custom_call.1} parent=1 // pred_check
      _
    $region39: #{tpu_custom_call.1} parent=1 // pred_check_branch
      %462 = sbr.rel (0) target = $region41
    $region40: #{tpu_custom_call.1} parent=1 // pred_region
      %463 = dma.done [#allocation4], 512
    $region41: #{tpu_custom_call.1} parent=1 // pred_fallthru
      _
    // Predicated region
    $region42: #{tpu_custom_call.1} parent=1 // pred_check
      _
    $region43: #{tpu_custom_call.1} parent=1 // pred_check_branch
      %465 = sbr.rel (0) target = $region45
    $region44: #{tpu_custom_call.1} parent=1 // pred_region
      %466 = dma.done [#allocation10], 512
    $region45: #{tpu_custom_call.1} parent=1 // pred_fallthru
      _
    // Predicated region
    $region46: #{tpu_custom_call.1} parent=1 // pred_check
      _
    $region47: #{tpu_custom_call.1} parent=1 // pred_check_branch
      %468 = sbr.rel (0) target = $region49
    $region48: #{tpu_custom_call.1} parent=1 // pred_region
      %469 = dma.done [#allocation10], 512
    $region49: #{tpu_custom_call.1} parent=1 // pred_fallthru
      _
    %470 = vsyncpa [#allocation3], 1
    %471 = vsyncpa [#allocation6], 1
    %472 = vsyncpa [#allocation4], 1
    %473 = vsyncpa [#allocation10], 1

</llo_original>
